<compile_context>
chip_gen: v6e
topology: v6e:2x2x1
jax: 0.10.0
libtpu: 0.0.40
codegen_flags: <defaults>
</compile_context>

<pallas_src>
import math

import jax
import jax.numpy as jnp
from jax.experimental import pallas as pl
from jax.experimental.pallas import tpu as pltpu


# ----------------------------- Pallas kernel --------------------------------
def _make_fused_kernel(tile_b: int, g: int, dy: int, compute_dtype):
    """Builds the fused broadcast + weighted-combine kernel.

    Kernel ref shapes (per grid step):
      w_ref : SMEM (3,) f32                -- per-operand weights (scalar prefetch)
      p_ref : VMEM (tile_b, tile_x, g)     -- P(x), packed g x-values per row
      q_ref : VMEM (tile_b, tile_x, g*dy)  -- Q(x,y), lane-dense packed
      r_ref : VMEM (tile_b, 1, g*dy)       -- R(y), tiled g times along lanes
      o_ref : VMEM (tile_b, tile_x, g*dy)  -- combined output tile
    """
    lanes = g * dy

    def kernel(w_ref, p_ref, q_ref, r_ref, o_ref):
        w0 = w_ref[0].astype(compute_dtype)
        w1 = w_ref[1].astype(compute_dtype)
        w2 = w_ref[2].astype(compute_dtype)

        if g > 1:
            # One-hot expansion matrix E[j, l] = 1  iff  j*dy <= l < (j+1)*dy.
            # Built with 2-D iotas + compares (no integer division); the
            # (tile_x, g) @ (g, lanes) matmul rides the otherwise idle MXU.
            lane = jax.lax.broadcasted_iota(jnp.int32, (g, lanes), 1)
            grp = jax.lax.broadcasted_iota(jnp.int32, (g, lanes), 0) * dy
            expand = ((lane >= grp) & (lane < grp + dy)).astype(compute_dtype)

        # tile_b is a small compile-time constant -> unrolled 2-D body.
        for bb in range(tile_b):
            p = p_ref[bb].astype(compute_dtype)    # (tile_x, g) or (tile_x, 1)
            q = q_ref[bb].astype(compute_dtype)    # (tile_x, lanes)
            r = r_ref[bb].astype(compute_dtype)    # (1, lanes)
            if g > 1:
                p = jnp.dot(p, expand,
                            preferred_element_type=jnp.float32
                            ).astype(compute_dtype)          # (tile_x, lanes)
            # Broadcasting happens on VMEM tiles (VPU/MXU), never in HBM.
            o_ref[bb] = (w0 * p + w1 * q + w2 * r).astype(o_ref.dtype)

    return kernel


# ------------------------------ tile selection -------------------------------
def _vmem_capacity_bytes() -> int:
    try:
        return int(pltpu.get_tpu_info().vmem_capacity_bytes)
    except Exception:
        return 64 << 20  # conservative (v7x per-TC physical VMEM)


def _pick_tiles(batch: int, rows: int, g: int, dy: int,
                in_bytes: int, out_bytes: int, budget: int):
    """Pick (tile_b, tile_x) so the whole double-buffered pipeline footprint
    (2x Q tile + 2x out tile + 2x P tile + 2x R tile) stays under `budget`."""
    lanes = g * dy
    per_row = 2 * (lanes * (in_bytes + out_bytes) + g * in_bytes)
    if rows * per_row <= budget:
        tile_x = rows
    else:
        tile_x = max(8, (budget // per_row) // 8 * 8)   # mult. of 8; cdiv grid
        tile_x = min(tile_x, rows)                      # handles ragged edge
    tile_b = 1
    if tile_x == rows:
        # A full per-batch slab is cheap -> block over batch to amortize the
        # ~0.35us per-grid-step pipeline overhead and grow DMA descriptors.
        per_batch = rows * per_row + 2 * lanes * in_bytes
        tile_b = int(min(batch, 8, max(1, budget // max(per_batch, 1))))
    return tile_b, tile_x


# ------------------------- NLNetwork forward (glue) --------------------------
def nl_network_forward(p_vals: jax.Array,
                       q_vals: jax.Array,
                       r_vals: jax.Array,
                       weight: jax.Array) -> jax.Array:
    """Emulates NLNetwork.forward for a parametrized head with operand atoms
         P(x)   -> valuation (B, Dx)
         Q(x,y) -> valuation (B, Dx, Dy)
         R(y)   -> valuation (B, Dy)
       Output variables (sorted union) = [x, y]  -> output shape (B, Dx, Dy).
    """
    B, Dx, Dy = q_vals.shape
    in_dtype = q_vals.dtype
    out_dtype = in_dtype                                   # match caller storage
    compute_dtype = jnp.bfloat16 if in_dtype == jnp.bfloat16 else jnp.float32
    in_bytes = jnp.dtype(in_dtype).itemsize
    out_bytes = jnp.dtype(out_dtype).itemsize

    # Lane-dense packing: fold g consecutive x rows into the lane dimension so
    # the last dim is (a multiple of) 128 and output stores are unmasked.
    if Dy < 128 and 128 % Dy == 0:
        g = math.gcd(Dx, 128 // Dy)
    else:
        g = 1
    lanes = g * Dy
    rows = Dx // g                                         # packed rows / batch

    # Free reshapes only (row-major contiguous); the "extend" broadcast of
    # NLModuleParametrized.prepare_transforms happens inside the kernel.
    pp = p_vals.reshape(B, rows, g)
    qp = q_vals.reshape(B, rows, lanes)
    rp = jnp.tile(r_vals, (1, g)).reshape(B, 1, lanes)     # tiny (B * lanes)

    # Per-generation VMEM budget for the *whole* double-buffered footprint.
    capacity = _vmem_capacity_bytes()
    budget = min(capacity // 3, 40 << 20)   # ~21 MiB on v7x, 40 MiB on v5e/v6e
    tile_b, tile_x = _pick_tiles(B, rows, g, Dy, in_bytes, out_bytes, budget)

    grid = (pl.cdiv(B, tile_b), pl.cdiv(rows, tile_x))

    footprint = 2 * tile_b * (tile_x * lanes * (in_bytes + out_bytes)
                              + tile_x * g * in_bytes
                              + lanes * in_bytes)
    vmem_limit = int(min(capacity, max(footprint + (8 << 20), 32 << 20)))

    flops = 5 * B * Dx * Dy                 # 3 mul + 2 add per output element
    bytes_accessed = int(pp.size * in_bytes + qp.size * in_bytes
                         + rp.size * in_bytes + B * rows * lanes * out_bytes)

    out = pl.pallas_call(
        _make_fused_kernel(tile_b, g, Dy, compute_dtype),
        out_shape=jax.ShapeDtypeStruct((B, rows, lanes), out_dtype),
        grid_spec=pltpu.PrefetchScalarGridSpec(
            num_scalar_prefetch=1,          # weight vector rides in SMEM
            grid=grid,                      # (batch tiles, packed-row tiles)
            in_specs=[
                pl.BlockSpec((tile_b, tile_x, g), lambda b, i, w: (b, i, 0)),
                pl.BlockSpec((tile_b, tile_x, lanes), lambda b, i, w: (b, i, 0)),
                pl.BlockSpec((tile_b, 1, lanes), lambda b, i, w: (b, 0, 0)),
            ],
            out_specs=pl.BlockSpec((tile_b, tile_x, lanes),
                                   lambda b, i, w: (b, i, 0)),
        ),
        compiler_params=pltpu.CompilerParams(
            # Both grid axes are independent -> shard across TCs on v7x.
            # (If profiling shows one TC idle, switch axis 0 to CORE_PARALLEL.)
            dimension_semantics=("parallel", "parallel"),
            vmem_limit_bytes=vmem_limit,
        ),
        cost_estimate=pl.CostEstimate(flops=flops, transcendentals=0,
                                      bytes_accessed=bytes_accessed),
    )(weight.astype(jnp.float32), pp, qp, rp)

    # Undo the lane packing (free reshape).
    return out.reshape(B, Dx, Dy)


# ---------------------------------- main -------------------------------------
if __name__ == "__main__":
    key = jax.random.PRNGKey(0)
    kp, kq, kr, kw = jax.random.split(key, 4)

    B, Dx, Dy = 2, 8, 16   # batch of structures, |domain_x|, |domain_y|
    K = 3                  # number of operands of the parametrized head

    # Deterministic synthetic atom valuations in [0, 1] (truth degrees).
    p_vals = jax.random.uniform(kp, (B, Dx), dtype=jnp.float32)
    q_vals = jax.random.uniform(kq, (B, Dx, Dy), dtype=jnp.float32)
    r_vals = jax.random.uniform(kr, (B, Dy), dtype=jnp.float32)

    # Deterministic head weights, shape (len(operands),) as in the module.
    weight = jax.random.uniform(kw, (K,), dtype=jnp.float32)

    out = jax.jit(nl_network_forward)(p_vals, q_vals, r_vals, weight)
    out = jax.block_until_ready(out)

    # Pure-JAX reference for the broadcast + weighted combination.
    ref = (weight[0] * p_vals[:, :, None]
           + weight[1] * q_vals
           + weight[2] * r_vals[:, None, :])

    assert out.shape == (B, Dx, Dy)
    assert out.dtype == q_vals.dtype
    assert jnp.allclose(out.astype(jnp.float32), ref, atol=1e-5, rtol=1e-5)

    print("KERNEL_OK")
</pallas_src>

<mosaic_0001>
module attributes {stable_mosaic.version = 11 : i64} {
  func.func @kernel(%arg0: i32, %arg1: i32, %arg2: memref<3xf32, #tpu.memory_space<smem>>, %arg3: memref<2x1x8xf32, #tpu.memory_space<vmem>>, %arg4: memref<2x1x128xf32, #tpu.memory_space<vmem>>, %arg5: memref<2x1x128xf32, #tpu.memory_space<vmem>>, %arg6: memref<2x1x128xf32, #tpu.memory_space<vmem>>) attributes {dimension_semantics = [#tpu.dimension_semantics<parallel>, #tpu.dimension_semantics<parallel>], iteration_bounds = array<i64: 1, 1>, scalar_prefetch = 1 : i64, scratch_operands = 0 : i64, tpu.core_type = #tpu.core_type<tc>, window_params = [{transform_indices = @transform_0, window_bounds = array<i64: 2, 1, 8>}, {transform_indices = @transform_1, window_bounds = array<i64: 2, 1, 128>}, {transform_indices = @transform_2, window_bounds = array<i64: 2, 1, 128>}, {transform_indices = @transform_3, window_bounds = array<i64: 2, 1, 128>}]} {
    %c0 = arith.constant 0 : index
    %0 = memref.load %arg2[%c0] : memref<3xf32, #tpu.memory_space<smem>>
    %c1 = arith.constant 1 : index
    %1 = memref.load %arg2[%c1] : memref<3xf32, #tpu.memory_space<smem>>
    %c2 = arith.constant 2 : index
    %2 = memref.load %arg2[%c2] : memref<3xf32, #tpu.memory_space<smem>>
    %3 = tpu.iota {dimensions = array<i32: 1>} : vector<8x128xi32>
    %4 = tpu.iota {dimensions = array<i32: 0>} : vector<8x128xi32>
    %c16_i32 = arith.constant 16 : i32
    %5 = vector.broadcast %c16_i32 : i32 to vector<8x128xi32>
    %6 = arith.muli %4, %5 : vector<8x128xi32>
    %7 = arith.cmpi sge, %3, %6 : vector<8x128xi32>
    %c16_i32_0 = arith.constant 16 : i32
    %8 = vector.broadcast %c16_i32_0 : i32 to vector<8x128xi32>
    %9 = arith.addi %6, %8 : vector<8x128xi32>
    %10 = arith.cmpi slt, %3, %9 : vector<8x128xi32>
    %11 = arith.andi %7, %10 : vector<8x128xi1>
    %12 = arith.extui %11 : vector<8x128xi1> to vector<8x128xi32>
    %13 = arith.sitofp %12 : vector<8x128xi32> to vector<8x128xf32>
    %c0_1 = arith.constant 0 : index
    %c0_2 = arith.constant 0 : index
    %c0_3 = arith.constant 0 : index
    %14 = vector.load %arg3[%c0_1, %c0_2, %c0_3] : memref<2x1x8xf32, #tpu.memory_space<vmem>>, vector<1x1x8xf32>
    %15 = vector.shape_cast %14 : vector<1x1x8xf32> to vector<1x8xf32>
    %c0_4 = arith.constant 0 : index
    %c0_5 = arith.constant 0 : index
    %c0_6 = arith.constant 0 : index
    %16 = vector.load %arg4[%c0_4, %c0_5, %c0_6] : memref<2x1x128xf32, #tpu.memory_space<vmem>>, vector<1x1x128xf32>
    %17 = vector.shape_cast %16 : vector<1x1x128xf32> to vector<1x128xf32>
    %c0_7 = arith.constant 0 : index
    %c0_8 = arith.constant 0 : index
    %c0_9 = arith.constant 0 : index
    %18 = vector.load %arg5[%c0_7, %c0_8, %c0_9] : memref<2x1x128xf32, #tpu.memory_space<vmem>>, vector<1x1x128xf32>
    %19 = vector.shape_cast %18 : vector<1x1x128xf32> to vector<1x128xf32>
    %cst = arith.constant dense<0.000000e+00> : vector<1x128xf32>
    %20 = tpu.matmul %15, %13, %cst {dimension_numbers = #tpu.dot_dimension_numbers<[1], [0], [0], [1], [0, 0, 1, 1], [], []>} : vector<1x8xf32>, vector<8x128xf32>, vector<1x128xf32> -> vector<1x128xf32>
    %21 = vector.broadcast %0 : f32 to vector<1x128xf32>
    %22 = arith.mulf %21, %20 : vector<1x128xf32>
    %23 = vector.broadcast %1 : f32 to vector<1x128xf32>
    %24 = arith.mulf %23, %17 : vector<1x128xf32>
    %25 = arith.addf %22, %24 : vector<1x128xf32>
    %26 = vector.broadcast %2 : f32 to vector<1x128xf32>
    %27 = arith.mulf %26, %19 : vector<1x128xf32>
    %28 = arith.addf %25, %27 : vector<1x128xf32>
    %c0_10 = arith.constant 0 : index
    %c0_11 = arith.constant 0 : index
    %c0_12 = arith.constant 0 : index
    %29 = vector.load %arg6[%c0_10, %c0_11, %c0_12] : memref<2x1x128xf32, #tpu.memory_space<vmem>>, vector<1x1x128xf32>
    %30 = vector.shape_cast %29 : vector<1x1x128xf32> to vector<1x128xf32>
    %31 = vector.shape_cast %28 : vector<1x128xf32> to vector<1x1x128xf32>
    tpu.vector_store %arg6[%c0_10, %c0_11, %c0_12], %31 {strides = array<i32>} : memref<2x1x128xf32, #tpu.memory_space<vmem>>, vector<1x1x128xf32>,
    %c1_13 = arith.constant 1 : index
    %c0_14 = arith.constant 0 : index
    %c0_15 = arith.constant 0 : index
    %32 = vector.load %arg3[%c1_13, %c0_14, %c0_15] : memref<2x1x8xf32, #tpu.memory_space<vmem>>, vector<1x1x8xf32>
    %33 = vector.shape_cast %32 : vector<1x1x8xf32> to vector<1x8xf32>
    %c1_16 = arith.constant 1 : index
    %c0_17 = arith.constant 0 : index
    %c0_18 = arith.constant 0 : index
    %34 = vector.load %arg4[%c1_16, %c0_17, %c0_18] : memref<2x1x128xf32, #tpu.memory_space<vmem>>, vector<1x1x128xf32>
    %35 = vector.shape_cast %34 : vector<1x1x128xf32> to vector<1x128xf32>
    %c1_19 = arith.constant 1 : index
    %c0_20 = arith.constant 0 : index
    %c0_21 = arith.constant 0 : index
    %36 = vector.load %arg5[%c1_19, %c0_20, %c0_21] : memref<2x1x128xf32, #tpu.memory_space<vmem>>, vector<1x1x128xf32>
    %37 = vector.shape_cast %36 : vector<1x1x128xf32> to vector<1x128xf32>
    %cst_22 = arith.constant dense<0.000000e+00> : vector<1x128xf32>
    %38 = tpu.matmul %33, %13, %cst_22 {dimension_numbers = #tpu.dot_dimension_numbers<[1], [0], [0], [1], [0, 0, 1, 1], [], []>} : vector<1x8xf32>, vector<8x128xf32>, vector<1x128xf32> -> vector<1x128xf32>
    %39 = vector.broadcast %0 : f32 to vector<1x128xf32>
    %40 = arith.mulf %39, %38 : vector<1x128xf32>
    %41 = vector.broadcast %1 : f32 to vector<1x128xf32>
    %42 = arith.mulf %41, %35 : vector<1x128xf32>
    %43 = arith.addf %40, %42 : vector<1x128xf32>
    %44 = vector.broadcast %2 : f32 to vector<1x128xf32>
    %45 = arith.mulf %44, %37 : vector<1x128xf32>
    %46 = arith.addf %43, %45 : vector<1x128xf32>
    %c1_23 = arith.constant 1 : index
    %c0_24 = arith.constant 0 : index
    %c0_25 = arith.constant 0 : index
    %47 = vector.load %arg6[%c1_23, %c0_24, %c0_25] : memref<2x1x128xf32, #tpu.memory_space<vmem>>, vector<1x1x128xf32>
    %48 = vector.shape_cast %47 : vector<1x1x128xf32> to vector<1x128xf32>
    %49 = vector.shape_cast %46 : vector<1x128xf32> to vector<1x1x128xf32>
    tpu.vector_store %arg6[%c1_23, %c0_24, %c0_25], %49 {strides = array<i32>} : memref<2x1x128xf32, #tpu.memory_space<vmem>>, vector<1x1x128xf32>,
    return
  }
  func.func @transform_0(%arg0: i32, %arg1: i32, %arg2: memref<3xf32, #tpu.memory_space<smem>>) -> (i32, i32, i32) {
    %c0_i32 = arith.constant 0 : i32
    %c0_i32_0 = arith.constant 0 : i32
    return %arg0, %arg1, %c0_i32 : i32, i32, i32
  }
  func.func @transform_1(%arg0: i32, %arg1: i32, %arg2: memref<3xf32, #tpu.memory_space<smem>>) -> (i32, i32, i32) {
    %c0_i32 = arith.constant 0 : i32
    %c0_i32_0 = arith.constant 0 : i32
    return %arg0, %arg1, %c0_i32 : i32, i32, i32
  }
  func.func @transform_2(%arg0: i32, %arg1: i32, %arg2: memref<3xf32, #tpu.memory_space<smem>>) -> (i32, i32, i32) {
    %c0_i32 = arith.constant 0 : i32
    %c0_i32_0 = arith.constant 0 : i32
    %c0_i32_1 = arith.constant 0 : i32
    return %arg0, %c0_i32, %c0_i32_0 : i32, i32, i32
  }
  func.func @transform_3(%arg0: i32, %arg1: i32, %arg2: memref<3xf32, #tpu.memory_space<smem>>) -> (i32, i32, i32) {
    %c0_i32 = arith.constant 0 : i32
    %c0_i32_0 = arith.constant 0 : i32
    return %arg0, %arg1, %c0_i32 : i32, i32, i32
  }
}

</mosaic_0001>

<llo_original>
// kernel: nl_network_forward.1
$region0: #{nl_network_forward.1}
  #allocation0 [shape = 'u32[]', space=smem, size = 0x4, offset = 0x4, fixed_abs, tag = 'smem constant byte address 0x4 - core index']
  #allocation1 [shape = 'u32[144,128]{1,0:T(1,128)}', space=vmem, size = 0x12000, scoped, tag = 'internal scratch']
  #allocation2 [shape = 's32[1]{0}', space=sflag, size = 0x4, scoped, tag = 'scoped memory for nl_network_forward.1']
  #allocation3 [shape = 'u8[512]{0}', space=smem, size = 0x200, scoped, tag = 'prefetched SMEM operand 0']
  %s0 = inlined_call_operand.vmem [shape: f32[3], index: 0, kind: input, shape index: {}]
  %s1 = inlined_call_operand.vmem [shape: f32[2,1,8], index: 1, kind: input, shape index: {}]
  %s2 = inlined_call_operand.vmem [shape: f32[2,1,128], index: 2, kind: input, shape index: {}]
  %s3 = inlined_call_operand.vmem [shape: f32[2,1,128], index: 3, kind: input, shape index: {}]
  %s4 = inlined_call_operand.vmem [shape: f32[2,1,128], index: 4, kind: output, shape index: {}]
  %s5 = sld [smem:[#allocation0]]
  $region22: #{nl_network_forward.1} parent=0
    _
  %s7 = ssub.s32 1, %s5
  %s8 = scalar_select 0, %s7, %s5
  %s9 = sshll.u32 %s0, 4
  %s10 = int_to_ptr.vmem [resolvable:$true] %s9
  %12 = dma.vmem_to_smem %s10, 16, [#allocation3], [#allocation2]
  %13 = dma.done [#allocation2], 16
  %14 = sfence
  // Predicated region
  $region2: #{nl_network_forward.1} parent=0 // pred_check
    _
  $region3: #{nl_network_forward.1} parent=0 // pred_check_branch
    %16 = sbr.rel (0) target = $region5
  $region4: #{nl_network_forward.1} parent=0 // pred_region
    _
  $region5: #{nl_network_forward.1} parent=0 // pred_fallthru
    _
  // Predicated region
  $region6: #{nl_network_forward.1} parent=0 // pred_check
    _
  $region7: #{nl_network_forward.1} parent=0 // pred_check_branch
    %18 = sbr.rel (0) target = $region9
  $region8: #{nl_network_forward.1} parent=0 // pred_region
    _
  $region9: #{nl_network_forward.1} parent=0 // pred_fallthru
    _
  // Predicated region
  $region10: #{nl_network_forward.1} parent=0 // pred_check
    _
  $region11: #{nl_network_forward.1} parent=0 // pred_check_branch
    %20 = sbr.rel (0) target = $region13
  $region12: #{nl_network_forward.1} parent=0 // pred_region
    _
  $region13: #{nl_network_forward.1} parent=0 // pred_fallthru
    _
  %s21 = sld [smem:[#allocation3]]
  %s22 = sld [smem:[#allocation3 + $0x1]]
  %s23 = sld [smem:[#allocation3 + $0x2]]
  %v24 = vlaneseq
  %v25 = vand.u32 %v24, 127
  %v26 = vlaneseq
  %v27 = vshrl.u32 %v26, 7
  %v28 = vmul.u32 %v27, 16
  %vm29 = vcmp.ge.s32.totalorder %v25, %v28
  %v30 = vadd.s32 %v28, 16
  %vm31 = vcmp.lt.s32.totalorder %v25, %v30
  %vm32 = vmand %vm29, %vm31
  %v33 = vsel %vm32, 1, 0
  %v34 = vcvt.s32.f32 %v33
  %v35 = vld [vmem:[%s1] sm:$0x1]
  %v36 = vld [vmem:[%s2] sm:$0x1]
  %v37 = vld [vmem:[%s3] sm:$0x1]
  %vm38 = vcmask 64512
  %v40 = vsel %vm38, %v35, 0
  %42 = vmatprep.subr.mxu0 0.0
  %43 = vmatpush1.msra.mxu0 0.0
  %44 = vmatprep.subr.mxu0 0.0
  %45 = vmatpush1.msra.mxu0 0.0
  %46 = vmatprep.subr.mxu0 0.0
  %47 = vmatpush1.msra.mxu0 0.0
  %48 = vmatprep.subr.mxu0 0.0
  %49 = vmatpush1.msra.mxu0 0.0
  %50 = vmatprep.subr.mxu0 0.0
  %51 = vmatpush1.msra.mxu0 0.0
  %52 = vmatprep.subr.mxu0 0.0
  %53 = vmatpush1.msra.mxu0 0.0
  %54 = vmatprep.subr.mxu0 0.0
  %55 = vmatpush1.msra.mxu0 0.0
  %56 = vmatprep.subr.mxu0 0.0
  %57 = vmatpush1.msra.mxu0 0.0
  %58 = vmatprep.subr.mxu0 0.0
  %59 = vmatpush1.msra.mxu0 0.0
  %60 = vmatprep.subr.mxu0 0.0
  %61 = vmatpush1.msra.mxu0 0.0
  %62 = vmatprep.subr.mxu0 0.0
  %63 = vmatpush1.msra.mxu0 0.0
  %64 = vmatprep.subr.mxu0 0.0
  %65 = vmatpush1.msra.mxu0 0.0
  %66 = vmatprep.subr.mxu0 0.0
  %67 = vmatpush1.msra.mxu0 0.0
  %68 = vmatprep.subr.mxu0 0.0
  %69 = vmatpush1.msra.mxu0 0.0
  %70 = vmatprep.subr.mxu0 0.0
  %71 = vmatpush1.msra.mxu0 0.0
  %72 = vmatprep.subr.mxu0 0.0
  %73 = vmatpush1.msra.mxu0 %v34
  %74 = vmatprep.subr.mxu0 0.0
  %75 = vmatpush2.msra.mxu0 0.0
  %76 = vmatprep.subr.mxu0 0.0
  %77 = vmatpush2.msra.mxu0 0.0
  %78 = vmatprep.subr.mxu0 0.0
  %79 = vmatpush2.msra.mxu0 0.0
  %80 = vmatprep.subr.mxu0 0.0
  %81 = vmatpush2.msra.mxu0 0.0
  %82 = vmatprep.subr.mxu0 0.0
  %83 = vmatpush2.msra.mxu0 0.0
  %84 = vmatprep.subr.mxu0 0.0
  %85 = vmatpush2.msra.mxu0 0.0
  %86 = vmatprep.subr.mxu0 0.0
  %87 = vmatpush2.msra.mxu0 0.0
  %88 = vmatprep.subr.mxu0 0.0
  %89 = vmatpush2.msra.mxu0 0.0
  %90 = vmatprep.subr.mxu0 0.0
  %91 = vmatpush2.msra.mxu0 0.0
  %92 = vmatprep.subr.mxu0 0.0
  %93 = vmatpush2.msra.mxu0 0.0
  %94 = vmatprep.subr.mxu0 0.0
  %95 = vmatpush2.msra.mxu0 0.0
  %96 = vmatprep.subr.mxu0 0.0
  %97 = vmatpush2.msra.mxu0 0.0
  %98 = vmatprep.subr.mxu0 0.0
  %99 = vmatpush2.msra.mxu0 0.0
  %100 = vmatprep.subr.mxu0 0.0
  %101 = vmatpush2.msra.mxu0 0.0
  %102 = vmatprep.subr.mxu0 0.0
  %103 = vmatpush2.msra.mxu0 0.0
  %104 = vmatprep.subr.mxu0 0.0
  %105 = vmatpush2.msra.mxu0 0.0
  %106 = vmatprep.mubr.f32.mxu0 0.0
  %107 = vmatmul.mubr.f32.gmra.mxu0 %v40
  %v108 = vpop.f32.mrf.mxu0
  %v109 = vadd.f32 0.0, %v108
  %v110 = vpop.f32.mrf.mxu0
  %111 = vdwg.mxu0
  %v112 = vstv %s21
  %v113 = vmul.f32 %v112, %v109
  %v114 = vstv %s22
  %v115 = vmul.f32 %v114, %v36
  %v116 = vadd.f32 %v113, %v115
  %v117 = vstv %s23
  %v118 = vmul.f32 %v117, %v37
  %v119 = vadd.f32 %v116, %v118
  %120 = vst [vmem:[%s4] sm:$0x1] %v119
  %s121 = scalar_lea.vmem %s1, 1
  %v122 = vld [vmem:[%s121] sm:$0x1]
  %s123 = scalar_lea.vmem %s2, 1
  %v124 = vld [vmem:[%s123] sm:$0x1]
  %s125 = scalar_lea.vmem %s3, 1
  %v126 = vld [vmem:[%s125] sm:$0x1]
  %v128 = vsel %vm38, %v122, 0
  %130 = vmatprep.subr.mxu0 0.0
  %131 = vmatpush1.msra.mxu0 0.0
  %132 = vmatprep.subr.mxu0 0.0
  %133 = vmatpush1.msra.mxu0 0.0
  %134 = vmatprep.subr.mxu0 0.0
  %135 = vmatpush1.msra.mxu0 0.0
  %136 = vmatprep.subr.mxu0 0.0
  %137 = vmatpush1.msra.mxu0 0.0
  %138 = vmatprep.subr.mxu0 0.0
  %139 = vmatpush1.msra.mxu0 0.0
  %140 = vmatprep.subr.mxu0 0.0
  %141 = vmatpush1.msra.mxu0 0.0
  %142 = vmatprep.subr.mxu0 0.0
  %143 = vmatpush1.msra.mxu0 0.0
  %144 = vmatprep.subr.mxu0 0.0
  %145 = vmatpush1.msra.mxu0 0.0
  %146 = vmatprep.subr.mxu0 0.0
  %147 = vmatpush1.msra.mxu0 0.0
  %148 = vmatprep.subr.mxu0 0.0
  %149 = vmatpush1.msra.mxu0 0.0
  %150 = vmatprep.subr.mxu0 0.0
  %151 = vmatpush1.msra.mxu0 0.0
  %152 = vmatprep.subr.mxu0 0.0
  %153 = vmatpush1.msra.mxu0 0.0
  %154 = vmatprep.subr.mxu0 0.0
  %155 = vmatpush1.msra.mxu0 0.0
  %156 = vmatprep.subr.mxu0 0.0
  %157 = vmatpush1.msra.mxu0 0.0
  %158 = vmatprep.subr.mxu0 0.0
  %159 = vmatpush1.msra.mxu0 0.0
  %160 = vmatprep.subr.mxu0 0.0
  %161 = vmatpush1.msra.mxu0 %v34
  %162 = vmatprep.subr.mxu0 0.0
  %163 = vmatpush2.msra.mxu0 0.0
  %164 = vmatprep.subr.mxu0 0.0
  %165 = vmatpush2.msra.mxu0 0.0
  %166 = vmatprep.subr.mxu0 0.0
  %167 = vmatpush2.msra.mxu0 0.0
  %168 = vmatprep.subr.mxu0 0.0
  %169 = vmatpush2.msra.mxu0 0.0
  %170 = vmatprep.subr.mxu0 0.0
  %171 = vmatpush2.msra.mxu0 0.0
  %172 = vmatprep.subr.mxu0 0.0
  %173 = vmatpush2.msra.mxu0 0.0
  %174 = vmatprep.subr.mxu0 0.0
  %175 = vmatpush2.msra.mxu0 0.0
  %176 = vmatprep.subr.mxu0 0.0
  %177 = vmatpush2.msra.mxu0 0.0
  %178 = vmatprep.subr.mxu0 0.0
  %179 = vmatpush2.msra.mxu0 0.0
  %180 = vmatprep.subr.mxu0 0.0
  %181 = vmatpush2.msra.mxu0 0.0
  %182 = vmatprep.subr.mxu0 0.0
  %183 = vmatpush2.msra.mxu0 0.0
  %184 = vmatprep.subr.mxu0 0.0
  %185 = vmatpush2.msra.mxu0 0.0
  %186 = vmatprep.subr.mxu0 0.0
  %187 = vmatpush2.msra.mxu0 0.0
  %188 = vmatprep.subr.mxu0 0.0
  %189 = vmatpush2.msra.mxu0 0.0
  %190 = vmatprep.subr.mxu0 0.0
  %191 = vmatpush2.msra.mxu0 0.0
  %192 = vmatprep.subr.mxu0 0.0
  %193 = vmatpush2.msra.mxu0 0.0
  %194 = vmatprep.mubr.f32.mxu0 0.0
  %195 = vmatmul.mubr.f32.gmra.mxu0 %v128
  %v196 = vpop.f32.mrf.mxu0
  %v197 = vadd.f32 0.0, %v196
  %v198 = vpop.f32.mrf.mxu0
  %199 = vdwg.mxu0
  %v200 = vmul.f32 %v112, %v197
  %v201 = vmul.f32 %v114, %v124
  %v202 = vadd.f32 %v200, %v201
  %v203 = vmul.f32 %v117, %v126
  %v204 = vadd.f32 %v202, %v203
  %s205 = scalar_lea.vmem %s4, 1
  %206 = vst [vmem:[%s205] sm:$0x1] %v204
  // Predicated region
  $region14: #{nl_network_forward.1} parent=0 // pred_check
    _
  $region15: #{nl_network_forward.1} parent=0 // pred_check_branch
    %208 = sbr.rel (0) target = $region17
  $region16: #{nl_network_forward.1} parent=0 // pred_region
    _
  $region17: #{nl_network_forward.1} parent=0 // pred_fallthru
    _
  // Predicated region
  $region18: #{nl_network_forward.1} parent=0 // pred_check
    _
  $region19: #{nl_network_forward.1} parent=0 // pred_check_branch
    %210 = sbr.rel (0) target = $region21
  $region20: #{nl_network_forward.1} parent=0 // pred_region
    _
  $region21: #{nl_network_forward.1} parent=0 // pred_fallthru
    _

</llo_original>
